<compile_context>
chip_gen: v7x
topology: tpu7x:2x2x1
jax: 0.10.0
libtpu: 0.0.40
codegen_flags: <defaults>
</compile_context>

<pallas_src>
import functools
import math

import jax
import jax.numpy as jnp
from jax.experimental import pallas as pl
from jax.experimental.pallas import tpu as pltpu


def _round_up(x, m):
    return ((x + m - 1) // m) * m


def _sharded_linear_kernel(x_ref, w_ref, b_ref, out_ref, acc_ref, *, with_relu):
    # x_ref:   (B_pad, TK)     bf16 -- batch rows, current K slice
    # w_ref:   (1, TK, TN)     bf16 -- this shard's (K, N)-oriented weight tile
    # b_ref:   (1, 1, TN)      f32  -- this shard's bias tile
    # out_ref: (B_pad, TN)          -- this shard's column slice of the gathered output
    # acc_ref: (B_pad, TN)     f32  -- VMEM accumulator, persists across the K loop
    k = pl.program_id(2)

    @pl.when(k == 0)
    def _init():
        acc_ref[...] = jnp.zeros_like(acc_ref)

    acc_ref[...] += jnp.dot(
        x_ref[...], w_ref[0], preferred_element_type=jnp.float32
    )

    @pl.when(k == pl.num_programs(2) - 1)
    def _epilogue():
        acc = acc_ref[...] + b_ref[0]          # (1, TN) broadcasts over batch rows
        if with_relu:
            acc = jnp.maximum(acc, 0.0)
        out_ref[...] = acc.astype(out_ref.dtype)


def sharded_linear_forward(x, weight_shards, bias_shards, *, with_relu,
                           compute_dtype=jnp.bfloat16):
    """Emulates ShardedLinear.forward across all ranks at once.

    x:             (B, in_features)              float32
    weight_shards: (world_size, out_shard, in_features)
    bias_shards:   (world_size, out_shard)
    Returns (partial_output_rank0, gathered_output), matching the PyTorch module
    (partial_output is rank 0's shard; gathered_output is concat over dim=1).
    """
    world_size, out_shard, in_features = weight_shards.shape
    B = x.shape[0]
    out_dtype = x.dtype

    # Lane-aligned tiles, sized well under VMEM on v5e/v6e (128 MiB) and v7x (64 MiB):
    # per-step footprint ~ 2*(x_tile + w_tile) + acc + out_tile  =  a few MiB max.
    TK = min(512, _round_up(in_features, 128))
    TN = min(256, _round_up(out_shard, 128))
    B_pad = _round_up(B, 16)                 # sublane alignment for bf16 operands
    K_pad = _round_up(in_features, TK)
    N_pad = _round_up(out_shard, TN)
    num_n = N_pad // TN
    num_k = K_pad // TK

    # Pre-transpose weights to (world, Kin, out_shard): MXU sees (M,K)x(K,N) directly.
    w_t = jnp.transpose(weight_shards, (0, 2, 1))

    x_p = jnp.pad(x, ((0, B_pad - B), (0, K_pad - in_features))).astype(compute_dtype)
    w_p = jnp.pad(
        w_t, ((0, 0), (0, K_pad - in_features), (0, N_pad - out_shard))
    ).astype(compute_dtype)
    b_p = jnp.pad(
        bias_shards, ((0, 0), (0, N_pad - out_shard))
    ).reshape(world_size, 1, N_pad).astype(jnp.float32)

    kernel = functools.partial(_sharded_linear_kernel, with_relu=with_relu)

    bytes_accessed = (
        x_p.size * x_p.dtype.itemsize * world_size * num_n   # x streamed per (r, n)
        + w_p.size * w_p.dtype.itemsize                      # each weight tile once
        + b_p.size * 4
        + B_pad * world_size * N_pad * jnp.dtype(out_dtype).itemsize
    )
    cost = pl.CostEstimate(
        flops=2 * B_pad * K_pad * world_size * N_pad,
        transcendentals=0,
        bytes_accessed=int(bytes_accessed),
    )

    gathered_padded = pl.pallas_call(
        kernel,
        out_shape=jax.ShapeDtypeStruct((B_pad, world_size * N_pad), out_dtype),
        grid=(world_size, num_n, num_k),
        in_specs=[
            pl.BlockSpec((B_pad, TK), lambda r, n, k: (0, k)),
            pl.BlockSpec((1, TK, TN), lambda r, n, k: (r, k, n)),
            pl.BlockSpec((1, 1, TN), lambda r, n, k: (r, 0, n)),
        ],
        # Scatter each shard's tile straight into its column slice of the
        # gathered output (constant across the trailing K axis => accumulator-safe).
        out_specs=pl.BlockSpec((B_pad, TN), lambda r, n, k: (0, r * num_n + n)),
        scratch_shapes=[pltpu.VMEM((B_pad, TN), jnp.float32)],
        compiler_params=pltpu.CompilerParams(
            dimension_semantics=("parallel", "parallel", "arbitrary"),
            vmem_limit_bytes=48 * 1024 * 1024,
        ),
        cost_estimate=cost,
    )(x_p, w_p, b_p)

    # Strip padding only if any was added (no-op relayout for aligned shapes).
    if B_pad == B and N_pad == out_shard:
        gathered_output = gathered_padded
    else:
        gathered_output = gathered_padded.reshape(B_pad, world_size, N_pad)[
            :B, :, :out_shard
        ].reshape(B, world_size * out_shard)

    partial_output_rank0 = gathered_output[:, :out_shard]
    # TODO(synk): output.requires_grad / retain_grad are autograd bookkeeping with
    # no Pallas/JAX-forward equivalent; omitted.
    return partial_output_rank0, gathered_output


def init_params(key, in_features, out_features, world_size):
    """Deterministic init matching nn.init.kaiming_uniform_(a=sqrt(5)) + bias."""
    out_shard = out_features // world_size
    fan_in = in_features
    w_bound = 1.0 / math.sqrt(fan_in)   # kaiming_uniform with a=sqrt(5)
    b_bound = 1.0 / math.sqrt(fan_in)
    kw, kb = jax.random.split(key)
    weight_shards = jax.random.uniform(
        kw, (world_size, out_shard, in_features),
        minval=-w_bound, maxval=w_bound, dtype=jnp.float32)
    bias_shards = jax.random.uniform(
        kb, (world_size, out_shard),
        minval=-b_bound, maxval=b_bound, dtype=jnp.float32)
    return weight_shards, bias_shards


if __name__ == "__main__":
    # Small, module-consistent shapes.
    batch = 8
    in_features = 32
    out_features = 64
    world_size = 2
    with_relu = True

    key = jax.random.PRNGKey(0)
    kx, kp = jax.random.split(key)
    x = jax.random.normal(kx, (batch, in_features), dtype=jnp.float32)
    weight_shards, bias_shards = init_params(kp, in_features, out_features, world_size)

    partial_out, gathered_out = sharded_linear_forward(
        x, weight_shards, bias_shards, with_relu=with_relu)
    jax.block_until_ready((partial_out, gathered_out))

    # Reference check in plain JAX (f32). bf16 compute path -> loosened tolerance.
    ref_partials = jnp.einsum("bk,rok->rbo", x, weight_shards) + bias_shards[:, None, :]
    if with_relu:
        ref_partials = jnp.maximum(ref_partials, 0.0)
    ref_gathered = jnp.transpose(ref_partials, (1, 0, 2)).reshape(batch, out_features)
    assert partial_out.shape == (batch, out_features // world_size)
    assert gathered_out.shape == (batch, out_features)
    assert jnp.allclose(partial_out, ref_partials[0], atol=5e-2, rtol=5e-2)
    assert jnp.allclose(gathered_out, ref_gathered, atol=5e-2, rtol=5e-2)

    print("KERNEL_OK")
</pallas_src>

<mosaic_0001>
module attributes {stable_mosaic.version = 11 : i64} {
  func.func @_sharded_linear_kernel(%arg0: i32, %arg1: i32, %arg2: i32, %arg3: memref<16x128xbf16, #tpu.memory_space<vmem>>, %arg4: memref<1x128x128xbf16, #tpu.memory_space<vmem>>, %arg5: memref<1x1x128xf32, #tpu.memory_space<vmem>>, %arg6: memref<16x128xf32, #tpu.memory_space<vmem>>, %arg7: memref<16x128xf32, #tpu.memory_space<vmem>>) attributes {dimension_semantics = [#tpu.dimension_semantics<parallel>, #tpu.dimension_semantics<parallel>, #tpu.dimension_semantics<arbitrary>], iteration_bounds = array<i64: 2, 1, 1>, scalar_prefetch = 0 : i64, scratch_operands = 1 : i64, tpu.core_type = #tpu.core_type<tc>, window_params = [{transform_indices = @transform_0, window_bounds = array<i64: 16, 128>}, {transform_indices = @transform_1, window_bounds = array<i64: 1, 128, 128>}, {transform_indices = @transform_2, window_bounds = array<i64: 1, 1, 128>}, {transform_indices = @transform_3, window_bounds = array<i64: 16, 128>}]} {
    %c0_i32 = arith.constant 0 : i32
    %0 = arith.cmpi eq, %arg2, %c0_i32 : i32
    %1 = arith.extui %0 : i1 to i32
    %c0_i32_0 = arith.constant 0 : i32
    %2 = arith.cmpi ne, %1, %c0_i32_0 : i32
    scf.if %2 {
      %cst_11 = arith.constant 0.000000e+00 : f32
      %13 = vector.broadcast %cst_11 : f32 to vector<16x128xf32>
      %c0_12 = arith.constant 0 : index
      %c0_13 = arith.constant 0 : index
      %14 = vector.load %arg7[%c0_12, %c0_13] : memref<16x128xf32, #tpu.memory_space<vmem>>, vector<16x128xf32>
      tpu.vector_store %arg7[%c0_12, %c0_13], %13 {strides = array<i32>} : memref<16x128xf32, #tpu.memory_space<vmem>>, vector<16x128xf32>,
    } else {
    }
    %c0 = arith.constant 0 : index
    %c0_1 = arith.constant 0 : index
    %3 = vector.load %arg7[%c0, %c0_1] : memref<16x128xf32, #tpu.memory_space<vmem>>, vector<16x128xf32>
    %c0_2 = arith.constant 0 : index
    %c0_3 = arith.constant 0 : index
    %4 = vector.load %arg3[%c0_2, %c0_3] : memref<16x128xbf16, #tpu.memory_space<vmem>>, vector<16x128xbf16>
    %c0_4 = arith.constant 0 : index
    %c0_5 = arith.constant 0 : index
    %c0_6 = arith.constant 0 : index
    %5 = vector.load %arg4[%c0_4, %c0_5, %c0_6] : memref<1x128x128xbf16, #tpu.memory_space<vmem>>, vector<1x128x128xbf16>
    %6 = vector.shape_cast %5 : vector<1x128x128xbf16> to vector<128x128xbf16>
    %cst = arith.constant dense<0.000000e+00> : vector<16x128xf32>
    %7 = tpu.matmul %4, %6, %cst {dimension_numbers = #tpu.dot_dimension_numbers<[1], [0], [0], [1], [0, 0, 1, 1], [], []>} : vector<16x128xbf16>, vector<128x128xbf16>, vector<16x128xf32> -> vector<16x128xf32>
    %8 = arith.addf %3, %7 : vector<16x128xf32>
    %c0_7 = arith.constant 0 : index
    %c0_8 = arith.constant 0 : index
    %9 = vector.load %arg7[%c0_7, %c0_8] : memref<16x128xf32, #tpu.memory_space<vmem>>, vector<16x128xf32>
    tpu.vector_store %arg7[%c0_7, %c0_8], %8 {strides = array<i32>} : memref<16x128xf32, #tpu.memory_space<vmem>>, vector<16x128xf32>,
    %c0_i32_9 = arith.constant 0 : i32
    %10 = arith.cmpi eq, %arg2, %c0_i32_9 : i32
    %11 = arith.extui %10 : i1 to i32
    %c0_i32_10 = arith.constant 0 : i32
    %12 = arith.cmpi ne, %11, %c0_i32_10 : i32
    scf.if %12 {
      %c0_11 = arith.constant 0 : index
      %c0_12 = arith.constant 0 : index
      %13 = vector.load %arg7[%c0_11, %c0_12] : memref<16x128xf32, #tpu.memory_space<vmem>>, vector<16x128xf32>
      %c0_13 = arith.constant 0 : index
      %c0_14 = arith.constant 0 : index
      %c0_15 = arith.constant 0 : index
      %14 = vector.load %arg5[%c0_13, %c0_14, %c0_15] : memref<1x1x128xf32, #tpu.memory_space<vmem>>, vector<1x1x128xf32>
      %15 = vector.shape_cast %14 : vector<1x1x128xf32> to vector<1x128xf32>
      %16 = vector.broadcast %15 : vector<1x128xf32> to vector<16x128xf32>
      %17 = arith.addf %13, %16 : vector<16x128xf32>
      %cst_16 = arith.constant 0.000000e+00 : f32
      %18 = vector.broadcast %cst_16 : f32 to vector<16x128xf32>
      %19 = arith.maximumf %17, %18 : vector<16x128xf32>
      %c0_17 = arith.constant 0 : index
      %c0_18 = arith.constant 0 : index
      %20 = vector.load %arg6[%c0_17, %c0_18] : memref<16x128xf32, #tpu.memory_space<vmem>>, vector<16x128xf32>
      tpu.vector_store %arg6[%c0_17, %c0_18], %19 {strides = array<i32>} : memref<16x128xf32, #tpu.memory_space<vmem>>, vector<16x128xf32>,
    } else {
    }
    return
  }
  func.func @transform_0(%arg0: i32, %arg1: i32, %arg2: i32) -> (i32, i32) {
    %c0_i32 = arith.constant 0 : i32
    %c0_i32_0 = arith.constant 0 : i32
    return %c0_i32, %arg2 : i32, i32
  }
  func.func @transform_1(%arg0: i32, %arg1: i32, %arg2: i32) -> (i32, i32, i32) {
    %c0_i32 = arith.constant 0 : i32
    return %arg0, %arg2, %arg1 : i32, i32, i32
  }
  func.func @transform_2(%arg0: i32, %arg1: i32, %arg2: i32) -> (i32, i32, i32) {
    %c0_i32 = arith.constant 0 : i32
    %c0_i32_0 = arith.constant 0 : i32
    return %arg0, %c0_i32, %arg1 : i32, i32, i32
  }
  func.func @transform_3(%arg0: i32, %arg1: i32, %arg2: i32) -> (i32, i32) {
    %c1_i32 = arith.constant 1 : i32
    %0 = arith.muli %arg0, %c1_i32 : i32
    %1 = arith.addi %0, %arg1 : i32
    %c0_i32 = arith.constant 0 : i32
    %c0_i32_0 = arith.constant 0 : i32
    return %c0_i32, %1 : i32, i32
  }
}

</mosaic_0001>

<llo_original>
// kernel: tpu_custom_call.1
$region0: #{tpu_custom_call.1}
  #allocation0 [shape = 'u32[]', space=smem, size = 0x4, offset = 0x4, fixed_abs, tag = 'smem constant byte address 0x4 - core index']
  #allocation1 [shape = 'u32[144,128]{1,0:T(1,128)}', space=vmem, size = 0x12000, scoped, tag = 'internal scratch']
  #allocation2 [shape = 'f32[16,128]{1,0:T(8,128)}', space=vmem, size = 0x2000, scoped, tag = 'scratch operand']
  %s0 = inlined_call_operand.hbm [shape: bf16[16,128], index: 0, kind: input, shape index: {}]
  %s1 = inlined_call_operand.hbm [shape: bf16[2,128,128], index: 1, kind: input, shape index: {}]
  %s2 = inlined_call_operand.vmem [shape: f32[2,1,128], index: 2, kind: input, shape index: {}]
  %s3 = inlined_call_operand.hbm [shape: f32[16,256], index: 3, kind: output, shape index: {}]
  %s4 = sld [smem:[#allocation0]]
  $region61: #{tpu_custom_call.1} parent=0
    _
  %s6 = ssub.s32 1, %s4
  %s7 = scalar_select 0, %s6, %s4
  $region1: #{tpu_custom_call.1} parent=0
    #allocation3 [shape = 'u8[4096]{0}', space=vmem, size = 0x1000, scoped, tag = 'input window, operand 0, single buffered']
    #allocation4 [shape = 's32[2]{0}', space=sflag, size = 0x8, scoped, tag = 'scoped memory for tpu_custom_call.1']
    #allocation5 [shape = 's32[2]{0}', space=sflag, size = 0x8, scoped, tag = 'scoped memory for tpu_custom_call.1']
    #allocation6 [shape = 'u8[65536]{0}', space=vmem, size = 0x10000, scoped, tag = 'input window, operand 1']
    #allocation7 [shape = 's32[2]{0}', space=sflag, size = 0x8, scoped, tag = 'scoped memory for tpu_custom_call.1']
    #allocation8 [shape = 'u8[16384]{0}', space=vmem, size = 0x4000, scoped, tag = 'output window, operand 0']
    %8 = vsyncpa [#allocation4], 0
    %9 = vsyncpa [#allocation7], 0
    %s10 = scalar_lea.sflag [#allocation7], 1
    %11 = vsyncpa %s10, 0
    %12 = vsyncpa [#allocation5], 0
    %s13 = scalar_lea.sflag [#allocation5], 1
    %14 = vsyncpa %s13, 0
    loop: start=0, step=1, limit=4
    $region2: #{tpu_custom_call.1} parent=1 // loop_pre_header
      _
    $region3: #{tpu_custom_call.1} parent=1 // loop_header
      %s16 = sphi 0, %s20
      %p17 = scmp.ge.s32.totalorder %s16, 4
      %s23 = sphi 0, %s42
      %s24 = sphi 0, %s38
      %s25 = sphi 0, %s34
      %s26 = sphi 0, %s23
      %s27 = sphi 0, %s24
      %s28 = sphi 0, %s25
      %s29 = sphi 0, %s26
      %s30 = sphi 0, %s27
      %s31 = sphi 0, %s28
      %s45 = sphi 0, %s47
      %s48 = sphi 0, %s45
      %s49 = sphi 0, %s48
      %s65 = sphi 0, %s49
      %s75 = sphi 0, %s77
      %s78 = sphi 0, %s75
      %s79 = sphi 0, %s78
      %s95 = sphi 0, %s79
      %s103 = sphi 0, %s105
      %s106 = sphi 0, %s103
      %s107 = sphi 0, %s106
      %s123 = sphi 0, %s107
      %s131 = sphi 0, %s133
      %s134 = sphi 0, %s131
      %s135 = sphi 0, %s134
      %s151 = sphi 0, %s135
    $region4: #{tpu_custom_call.1} parent=1 // loop_header_branch
      %19 = sbr.rel (%p17) target = $region8
    $region5: #{tpu_custom_call.1} parent=1 // loop_body
      %s21 = ssub.s32 %s16, 1
      %s22 = ssub.s32 %s16, 2
      %s32 = sadd.s32 1, %s25
      %p33 = scmp.ge.s32.totalorder %s32, 1
      %s34 = scalar_select %p33, 0, %s32
      %s35 = sadd.s32 1, %s24
      %s36 = scalar_select %p33, %s35, %s24
      %p37 = scmp.ge.s32.totalorder %s36, 1
      %s38 = scalar_select %p37, 0, %s36
      %s39 = sadd.s32 1, %s23
      %s40 = scalar_select %p37, %s39, %s23
      %p41 = scmp.ge.s32.totalorder %s40, 2
      %s42 = scalar_select %p41, 0, %s40
      %s43 = ssub.s32 %s25, %s34
      %p44 = scmp.eq.s32.totalorder %s43, 0
      %s46 = sadd.s32 %s45, 1
      %s47 = scalar_select %p44, %s45, %s46
      %p50 = pneg %p44
      %p51 = scmp.eq.s32.totalorder %s16, 1
      %p52 = por %p50, %p51
      %p53 = scmp.ne.s32.totalorder %s45, %s48
      %p54 = scmp.eq.s32.totalorder %s16, 0
      %p55 = por %p53, %p54
      %p56 = scmp.ne.s32.totalorder %s45, %s48
      %p57 = scmp.eq.s32.totalorder %s21, 1
      %p58 = por %p56, %p57
      %p59 = scmp.ne.s32.totalorder %s48, %s49
      %p60 = scmp.eq.s32.totalorder %s21, 0
      %p61 = por %p59, %p60
      %p62 = scmp.ne.s32.totalorder %s48, %s49
      %p63 = scmp.eq.s32.totalorder %s22, 1
      %p64 = por %p62, %p63
      %p66 = scmp.ne.s32.totalorder %s49, %s65
      %p67 = scmp.eq.s32.totalorder %s22, 0
      %p68 = por %p66, %p67
      %s69 = ssub.s32 %s23, %s42
      %s70 = ssub.s32 %s25, %s34
      %s71 = sor.u32 %s69, %s70
      %s72 = ssub.s32 %s24, %s38
      %s73 = sor.u32 %s71, %s72
      %p74 = scmp.eq.s32.totalorder %s73, 0
      %s76 = sadd.s32 %s75, 1
      %s77 = scalar_select %p74, %s75, %s76
      %p80 = pneg %p74
      %p81 = scmp.eq.s32.totalorder %s16, 1
      %p82 = por %p80, %p81
      %p83 = scmp.ne.s32.totalorder %s75, %s78
      %p84 = scmp.eq.s32.totalorder %s16, 0
      %p85 = por %p83, %p84
      %p86 = scmp.ne.s32.totalorder %s75, %s78
      %p87 = scmp.eq.s32.totalorder %s21, 1
      %p88 = por %p86, %p87
      %p89 = scmp.ne.s32.totalorder %s78, %s79
      %p90 = scmp.eq.s32.totalorder %s21, 0
      %p91 = por %p89, %p90
      %p92 = scmp.ne.s32.totalorder %s78, %s79
      %p93 = scmp.eq.s32.totalorder %s22, 1
      %p94 = por %p92, %p93
      %p96 = scmp.ne.s32.totalorder %s79, %s95
      %p97 = scmp.eq.s32.totalorder %s22, 0
      %p98 = por %p96, %p97
      %s99 = ssub.s32 %s23, %s42
      %s100 = ssub.s32 %s24, %s38
      %s101 = sor.u32 %s99, %s100
      %p102 = scmp.eq.s32.totalorder %s101, 0
      %s104 = sadd.s32 %s103, 1
      %s105 = scalar_select %p102, %s103, %s104
      %p108 = pneg %p102
      %p109 = scmp.eq.s32.totalorder %s16, 1
      %p110 = por %p108, %p109
      %p111 = scmp.ne.s32.totalorder %s103, %s106
      %p112 = scmp.eq.s32.totalorder %s16, 0
      %p113 = por %p111, %p112
      %p114 = scmp.ne.s32.totalorder %s103, %s106
      %p115 = scmp.eq.s32.totalorder %s21, 1
      %p116 = por %p114, %p115
      %p117 = scmp.ne.s32.totalorder %s106, %s107
      %p118 = scmp.eq.s32.totalorder %s21, 0
      %p119 = por %p117, %p118
      %p120 = scmp.ne.s32.totalorder %s106, %s107
      %p121 = scmp.eq.s32.totalorder %s22, 1
      %p122 = por %p120, %p121
      %p124 = scmp.ne.s32.totalorder %s107, %s123
      %p125 = scmp.eq.s32.totalorder %s22, 0
      %p126 = por %p124, %p125
      %s127 = sadd.s32 %s23, %s24
      %s128 = sadd.s32 %s42, %s38
      %s129 = ssub.s32 %s127, %s128
      %p130 = scmp.eq.s32.totalorder %s129, 0
      %s132 = sadd.s32 %s131, 1
      %s133 = scalar_select %p130, %s131, %s132
      %p136 = pneg %p130
      %p137 = scmp.eq.s32.totalorder %s16, 1
      %p138 = por %p136, %p137
      %p139 = scmp.ne.s32.totalorder %s131, %s134
      %p140 = scmp.eq.s32.totalorder %s16, 0
      %p141 = por %p139, %p140
      %p142 = scmp.ne.s32.totalorder %s131, %s134
      %p143 = scmp.eq.s32.totalorder %s21, 1
      %p144 = por %p142, %p143
      %p145 = scmp.ne.s32.totalorder %s134, %s135
      %p146 = scmp.eq.s32.totalorder %s21, 0
      %p147 = por %p145, %p146
      %p148 = scmp.ne.s32.totalorder %s134, %s135
      %p149 = scmp.eq.s32.totalorder %s22, 1
      %p150 = por %p148, %p149
      %p152 = scmp.ne.s32.totalorder %s135, %s151
      %p153 = scmp.eq.s32.totalorder %s22, 0
      %p154 = por %p152, %p153
      %p155 = scmp.le.s32.totalorder 1, %s16
      %p156 = scmp.lt.s32.totalorder %s16, 3
      %p157 = pnand %p155, %p156
      %p158 = pneg %p157
      // Predicated region
      $region9: #{tpu_custom_call.1} parent=5 // pred_check
        _
      $region10: #{tpu_custom_call.1} parent=5 // pred_check_branch
        %160 = sbr.rel (%p157) target = $region12
      $region11: #{tpu_custom_call.1} parent=5 // pred_region
        %s161 = ssub.s32 %s16, 1
        // Predicated region
        $region13: #{tpu_custom_call.1} parent=11 // pred_check
          %p162 = pneg %p61
        $region14: #{tpu_custom_call.1} parent=11 // pred_check_branch
          %164 = sbr.rel (%p162) target = $region16
        $region15: #{tpu_custom_call.1} parent=11 // pred_region
          %s166 = ssub.s32 128, 128
          %167 = vsyncadd [#allocation4], %s166
          %s168 = smul.addr %s28, 64
          %s169 = scalar_lea.hbm %s0, %s168
          %s170 = sshll.u32 [#allocation3], 4
          %s171 = int_to_ptr.vmem [resolvable:$true] %s170
          %176 = dma.hbm_to_vmem [thread:$0]  %s169, 128, %s171, [#allocation4], 64, 64, 4
        $region16: #{tpu_custom_call.1} parent=11 // pred_fallthru
          _
      $region12: #{tpu_custom_call.1} parent=5 // pred_fallthru
        _
      %p177 = scmp.lt.s32.totalorder %s16, 2
      // Predicated region
      $region17: #{tpu_custom_call.1} parent=5 // pred_check
        %p178 = pneg %p177
      $region18: #{tpu_custom_call.1} parent=5 // pred_check_branch
        %180 = sbr.rel (%p178) target = $region20
      $region19: #{tpu_custom_call.1} parent=5 // pred_region
        // Predicated region
        $region21: #{tpu_custom_call.1} parent=19 // pred_check
          %p181 = pneg %p85
        $region22: #{tpu_custom_call.1} parent=19 // pred_check_branch
          %183 = sbr.rel (%p181) target = $region24
        $region23: #{tpu_custom_call.1} parent=19 // pred_region
          %s184 = sand.u32 %s75, 1
          %s185 = scalar_lea.sflag [#allocation7], %s184
          %s186 = sand.u32 %s75, 1
          %s187 = smul.addr %s186, 64
          %s188 = scalar_lea.vmem [#allocation6], %s187
          %s189 = smul.u32 16, %s25
          %s191 = ssub.s32 1024, 1024
          %192 = vsyncadd %s185, %s191
          %s193 = sadd.s32 %s24, %s189
          %s194 = smul.addr %s23, 16
          %s195 = sadd.s32 %s193, %s194
          %s196 = smul.addr %s195, 64
          %s197 = scalar_lea.hbm %s1, %s196
          %s198 = sshll.u32 %s188, 4
          %s199 = int_to_ptr.vmem [resolvable:$true] %s198
          %204 = dma.hbm_to_vmem [thread:$0]  %s197, 1024, %s199, %s185, 64, 64, 4
        $region24: #{tpu_custom_call.1} parent=19 // pred_fallthru
          _
        // Predicated region
        $region25: #{tpu_custom_call.1} parent=19 // pred_check
          %p205 = pneg %p113
        $region26: #{tpu_custom_call.1} parent=19 // pred_check_branch
          %207 = sbr.rel (%p205) target = $region28
        $region27: #{tpu_custom_call.1} parent=19 // pred_region
          %p208 = scmp.lt.s32.totalorder %s23, 1
          %s209 = scalar_select %p208, %s23, 1
          %p210 = scmp.lt.s32.totalorder %s24, 0
          %s211 = scalar_select %p210, %s24, 0
          %s212 = sadd.s32 %s211, %s209
          %s213 = scalar_lea.vmem %s2, %s212
        $region28: #{tpu_custom_call.1} parent=19 // pred_fallthru
          _
      $region20: #{tpu_custom_call.1} parent=5 // pred_fallthru
        _
      %p214 = scmp.le.s32.totalorder 1, %s16
      %p215 = scmp.lt.s32.totalorder %s16, 3
      %p216 = pnand %p214, %p215
      %p217 = pneg %p216
      // Predicated region
      $region29: #{tpu_custom_call.1} parent=5 // pred_check
        _
      $region30: #{tpu_custom_call.1} parent=5 // pred_check_branch
        %219 = sbr.rel (%p216) target = $region32
      $region31: #{tpu_custom_call.1} parent=5 // pred_region
        %s220 = ssub.s32 %s16, 1
        // Predicated region
        $region33: #{tpu_custom_call.1} parent=31 // pred_check
          %p221 = pneg %p61
        $region34: #{tpu_custom_call.1} parent=31 // pred_check_branch
          %223 = sbr.rel (%p221) target = $region36
        $region35: #{tpu_custom_call.1} parent=31 // pred_region
          %224 = dma.done [#allocation4], 128
        $region36: #{tpu_custom_call.1} parent=31 // pred_fallthru
          _
        %s225 = sand.u32 %s78, 1
        %s226 = scalar_lea.sflag [#allocation7], %s225
        %s227 = sand.u32 %s78, 1
        %s228 = smul.addr %s227, 64
        %s229 = scalar_lea.vmem [#allocation6], %s228
        // Predicated region
        $region37: #{tpu_custom_call.1} parent=31 // pred_check
          %p230 = pneg %p91
        $region38: #{tpu_custom_call.1} parent=31 // pred_check_branch
          %232 = sbr.rel (%p230) target = $region40
        $region39: #{tpu_custom_call.1} parent=31 // pred_region
          %233 = dma.done %s226, 1024
        $region40: #{tpu_custom_call.1} parent=31 // pred_fallthru
          _
        %p234 = pneg %p61
        %p235 = pneg %p58
        %s236 = sand.u32 %s78, 1
        %s237 = scalar_lea.sflag [#allocation7], %s236
        %s238 = sand.u32 %s78, 1
        %s239 = smul.addr %s238, 64
        %s240 = scalar_lea.vmem [#allocation6], %s239
        %p241 = pneg %p91
        %p242 = pneg %p88
        %p243 = scmp.lt.s32.totalorder %s26, 1
        %s244 = scalar_select %p243, %s26, 1
        %p245 = scmp.lt.s32.totalorder %s27, 0
        %s246 = scalar_select %p245, %s27, 0
        %s247 = sadd.s32 %s246, %s244
        %s248 = scalar_lea.vmem %s2, %s247
        %p249 = pneg %p119
        %p250 = pneg %p116
        %p251 = pneg %p147
        %p252 = pneg %p144
        %s253 = sand.u32 %s134, 1
        %s254 = scalar_lea.sflag [#allocation5], %s253
        %s255 = sand.u32 %s134, 1
        %s256 = smul.addr %s255, 16
        %s257 = scalar_lea.vmem [#allocation8], %s256
        %s258 = smul.u32 16, %s28
        %p259 = scmp.lt.s32.totalorder %s26, 1
        %s260 = scalar_select %p259, %s26, 1
        %p261 = scmp.lt.s32.totalorder %s27, 0
        %s262 = scalar_select %p261, %s27, 0
        %s263 = sadd.s32 %s262, %s260
        %s264 = scalar_lea.vmem %s2, %s263
        %s265 = sadd.s32 %s26, %s27
        %p267 = scmp.eq.s32.totalorder %s28, 0
        // Predicated region
        $region41: #{tpu_custom_call.1} parent=31 // pred_check
          %p268 = pneg %p267
        $region42: #{tpu_custom_call.1} parent=31 // pred_check_branch
          %270 = sbr.rel (%p268) target = $region44
        $region43: #{tpu_custom_call.1} parent=31 // pred_region
          %271 = vst [vmem:[#allocation2] sm:$0xff] 0.0
          %272 = vst [vmem:[#allocation2 + $0x8] sm:$0xff] 0.0
        $region44: #{tpu_custom_call.1} parent=31 // pred_fallthru
          _
        %v273 = vld [vmem:[#allocation2] sm:$0xff]
        %v274 = vld [vmem:[#allocation2 + $0x8] sm:$0xff]
        %v275 = vld [vmem:[#allocation3] sm:$0xf]
        %v276 = vld [vmem:[#allocation3 + $0x4] sm:$0xf]
        %v277 = vld [vmem:[%s229] sm:$0xf]
        %v278 = vld [vmem:[%s229 + $0x4] sm:$0xf]
        %v279 = vld [vmem:[%s229 + $0x8] sm:$0xf]
        %v280 = vld [vmem:[%s229 + $0xc] sm:$0xf]
        %v281 = vld [vmem:[%s229 + $0x10] sm:$0xf]
        %v282 = vld [vmem:[%s229 + $0x14] sm:$0xf]
        %v283 = vld [vmem:[%s229 + $0x18] sm:$0xf]
        %v284 = vld [vmem:[%s229 + $0x1c] sm:$0xf]
        %v285 = vld [vmem:[%s229 + $0x20] sm:$0xf]
        %v286 = vld [vmem:[%s229 + $0x24] sm:$0xf]
        %v287 = vld [vmem:[%s229 + $0x28] sm:$0xf]
        %v288 = vld [vmem:[%s229 + $0x2c] sm:$0xf]
        %v289 = vld [vmem:[%s229 + $0x30] sm:$0xf]
        %v290 = vld [vmem:[%s229 + $0x34] sm:$0xf]
        %v291 = vld [vmem:[%s229 + $0x38] sm:$0xf]
        %v292 = vld [vmem:[%s229 + $0x3c] sm:$0xf]
        %v295 = vunpack.c.l.b16 %v275
        %v296 = vunpack.c.l.b16 %v276
        %v297 = vpack.c.b16 %v296, %v295
        %v315 = vunpack.c.l.b16 %v277
        %v316 = vunpack.c.l.b16 %v278
        %v317 = vunpack.c.l.b16 %v279
        %v318 = vunpack.c.l.b16 %v280
        %v319 = vunpack.c.l.b16 %v281
        %v320 = vunpack.c.l.b16 %v282
        %v321 = vunpack.c.l.b16 %v283
        %v322 = vunpack.c.l.b16 %v284
        %v323 = vunpack.c.l.b16 %v285
        %v324 = vunpack.c.l.b16 %v286
        %v325 = vunpack.c.l.b16 %v287
        %v326 = vunpack.c.l.b16 %v288
        %v327 = vunpack.c.l.b16 %v289
        %v328 = vunpack.c.l.b16 %v290
        %v329 = vunpack.c.l.b16 %v291
        %v330 = vunpack.c.l.b16 %v292
        %v331 = vpack.c.b16 %v316, %v315
        %v332 = vpack.c.b16 %v318, %v317
        %v333 = vpack.c.b16 %v320, %v319
        %v334 = vpack.c.b16 %v322, %v321
        %v335 = vpack.c.b16 %v324, %v323
        %v336 = vpack.c.b16 %v326, %v325
        %v337 = vpack.c.b16 %v328, %v327
        %v338 = vpack.c.b16 %v330, %v329
        %347 = vmatprep.subr.bf16.mxu0 0
        %348 = vmatpush1.bf16.msra.mxu0 %v331
        %349 = vmatprep.subr.bf16.mxu0 0
        %350 = vmatpush1.bf16.msra.mxu0 %v332
        %351 = vmatprep.subr.bf16.mxu0 0
        %352 = vmatpush1.bf16.msra.mxu0 %v333
        %353 = vmatprep.subr.bf16.mxu0 0
        %354 = vmatpush1.bf16.msra.mxu0 %v334
        %355 = vmatprep.subr.bf16.mxu0 0
        %356 = vmatpush1.bf16.msra.mxu0 %v335
        %357 = vmatprep.subr.bf16.mxu0 0
        %358 = vmatpush1.bf16.msra.mxu0 %v336
        %359 = vmatprep.subr.bf16.mxu0 0
        %360 = vmatpush1.bf16.msra.mxu0 %v337
        %361 = vmatprep.subr.bf16.mxu0 0
        %362 = vmatpush1.bf16.msra.mxu0 %v338
        %363 = vmatprep.subr.bf16.mxu0 0
        %364 = vmatpush1.bf16.msra.mxu0 0
        %365 = vmatprep.subr.bf16.mxu0 0
        %366 = vmatpush1.bf16.msra.mxu0 0
        %367 = vmatprep.subr.bf16.mxu0 0
        %368 = vmatpush1.bf16.msra.mxu0 0
        %369 = vmatprep.subr.bf16.mxu0 0
        %370 = vmatpush1.bf16.msra.mxu0 0
        %371 = vmatprep.subr.bf16.mxu0 0
        %372 = vmatpush1.bf16.msra.mxu0 0
        %373 = vmatprep.subr.bf16.mxu0 0
        %374 = vmatpush1.bf16.msra.mxu0 0
        %375 = vmatprep.subr.bf16.mxu0 0
        %376 = vmatpush1.bf16.msra.mxu0 0
        %377 = vmatprep.subr.bf16.mxu0 0
        %378 = vmatpush1.bf16.msra.mxu0 0
        %379 = vmatprep.mubr.bf16.mxu0 0
        %380 = vmatmul.mubr.bf16.gmra.mrb[0].mxu0 %v297
        %v381 = vpop.f32.mrb[0].mxu0
        %v382 = vadd.f32 0.0, %v381
        %v383 = vpop.f32.mrb[0].mxu0
        %v384 = vpop.f32.mrb[0].mxu0
        %v385 = vadd.f32 0.0, %v384
        %v386 = vpop.f32.mrb[0].mxu0
        %387 = vdwg.mxu0
        %v388 = vadd.f32 %v273, %v382
        %v389 = vadd.f32 %v274, %v385
        %390 = vst [vmem:[#allocation2] sm:$0xff] %v388
        %391 = vst [vmem:[#allocation2 + $0x8] sm:$0xff] %v389
        // Predicated region
        $region45: #{tpu_custom_call.1} parent=31 // pred_check
          %p392 = pneg %p267
        $region46: #{tpu_custom_call.1} parent=31 // pred_check_branch
          %394 = sbr.rel (%p392) target = $region48
        $region47: #{tpu_custom_call.1} parent=31 // pred_region
          %v395 = vld [vmem:[#allocation2] sm:$0xff]
          %v396 = vld [vmem:[#allocation2 + $0x8] sm:$0xff]
          %v397 = vld [vmem:[%s264] sm:$0x1]
          %v399 = vlaneseq
          %v400 = vshrl.u32 %v399, 7
          %v401 = vsub.s32 0, %v400
          %v402 = vrot.slane %v397, %v401
          %v404 = vadd.f32 %v395, %v402
          %v405 = vadd.f32 %v396, %v402
          %v406 = vmax.f32 %v404, 0.0
          %v407 = vmax.f32 %v405, 0.0
          %408 = vst [vmem:[%s257] sm:$0xff] %v406
          %409 = vst [vmem:[%s257 + $0x8] sm:$0xff] %v407
        $region48: #{tpu_custom_call.1} parent=31 // pred_fallthru
          _
        %s410 = sand.u32 %s134, 1
        %s411 = scalar_lea.sflag [#allocation5], %s410
        %s412 = sand.u32 %s134, 1
        %s413 = smul.addr %s412, 16
        %s414 = scalar_lea.vmem [#allocation8], %s413
        // Predicated region
        $region49: #{tpu_custom_call.1} parent=31 // pred_check
          %p415 = pneg %p144
        $region50: #{tpu_custom_call.1} parent=31 // pred_check_branch
          %417 = sbr.rel (%p415) target = $region52
        $region51: #{tpu_custom_call.1} parent=31 // pred_region
          %s418 = sadd.s32 %s26, %s27
          %s420 = ssub.s32 256, 256
          %421 = vsyncadd %s411, %s420
          %s422 = smul.addr %s418, 128
          %s423 = scalar_lea.hbm %s3, %s422
          %s424 = sshll.u32 %s414, 4
          %s425 = int_to_ptr.vmem [resolvable:$true] %s424
          %430 = dma.vmem_to_hbm [thread:$0]  %s425, 256, %s423, %s411, 128, 256, 8
        $region52: #{tpu_custom_call.1} parent=31 // pred_fallthru
          _
      $region32: #{tpu_custom_call.1} parent=5 // pred_fallthru
        _
      %p431 = scmp.le.s32.totalorder 2, %s16
      // Predicated region
      $region53: #{tpu_custom_call.1} parent=5 // pred_check
        %p432 = pneg %p431
      $region54: #{tpu_custom_call.1} parent=5 // pred_check_branch
        %434 = sbr.rel (%p432) target = $region56
      $region55: #{tpu_custom_call.1} parent=5 // pred_region
        %s435 = ssub.s32 %s16, 2
        // Predicated region
        $region57: #{tpu_custom_call.1} parent=55 // pred_check
          %p436 = pneg %p150
        $region58: #{tpu_custom_call.1} parent=55 // pred_check_branch
          %438 = sbr.rel (%p436) target = $region60
        $region59: #{tpu_custom_call.1} parent=55 // pred_region
          %s439 = sand.u32 %s135, 1
          %s440 = scalar_lea.sflag [#allocation5], %s439
          %s441 = sand.u32 %s135, 1
          %s442 = smul.addr %s441, 16
          %s443 = scalar_lea.vmem [#allocation8], %s442
          %444 = dma.done %s440, 256
        $region60: #{tpu_custom_call.1} parent=55 // pred_fallthru
          _
      $region56: #{tpu_custom_call.1} parent=5 // pred_fallthru
        _
    $region6: #{tpu_custom_call.1} parent=1 // loop_footer
      %s20 = sadd.s32 1, %s16
    $region7: #{tpu_custom_call.1} parent=1 // loop_footer_branch
      %15 = sbr.rel target = $region3
    $region8: #{tpu_custom_call.1} parent=1 // loop_exit
      _
    %445 = vsyncpa [#allocation4], 1
    %s446 = scalar_lea.sflag [#allocation4], 1
    %447 = vsyncpa %s446, 1
    %448 = vsyncpa [#allocation7], 1
    %s449 = scalar_lea.sflag [#allocation7], 1
    %450 = vsyncpa %s449, 1
    %451 = vsyncpa [#allocation5], 1
    %s452 = scalar_lea.sflag [#allocation5], 1
    %453 = vsyncpa %s452, 1

</llo_original>
